<compile_context>
chip_gen: v7x
topology: tpu7x:2x2x1
jax: 0.10.0
libtpu: 0.0.40
codegen_flags: <defaults>
</compile_context>

<pallas_src>
import functools

import jax
import jax.numpy as jnp
from jax import lax
from jax.experimental import pallas as pl
from jax.experimental.pallas import tpu as pltpu


def _conv_tsa_kernel(mask_ref, x_ref, w_ref, o_ref, xs_ref, *, W, HW, HW_TILE, Cin):
    # mask_ref: (2, HW)            row 0: drop-last-column, row 1: drop-first-column
    # x_ref   : (1, Cin, HW)       flattened NCHW input (resident across the t axis)
    # w_ref   : (3, Cout, 3*Cin)   per-kh weight slab, kw folded into the K axis
    # o_ref   : (1, Cout, HW_TILE) flattened NCHW output tile (lane-dense)
    # xs_ref  : (3*Cin, HW + 2*W)  kw-stacked, horizontally pre-masked image + halo
    t = pl.program_id(1)
    Cout = o_ref.shape[1]

    # ---- build the kw-stacked image once per batch element (t == 0) ----------
    @pl.when(t == 0)
    def _build():
        # zero only the two halo bands; the rest is fully overwritten below.
        band = jnp.zeros((3 * Cin, W + 1), xs_ref.dtype)
        xs_ref[:, 0:W + 1] = band
        xs_ref[:, HW + W - 1:HW + 2 * W] = band
        # chunked so the build stays register-friendly for large images
        for c0 in range(0, HW, HW_TILE):
            xv = x_ref[0, :, c0:c0 + HW_TILE]                    # (Cin, CH)
            m_last = mask_ref[0:1, c0:c0 + HW_TILE]              # (1, CH)
            m_first = mask_ref[1:2, c0:c0 + HW_TILE]             # (1, CH)
            # row-block j holds x shifted by dw = j-1: store unshifted x at lane
            # offset (W - dw) so the reads at [tile + kh*W] see the shifted view;
            # the write-side masks implement the horizontal edge zeroing exactly.
            xs_ref[0 * Cin:1 * Cin, W + 1 + c0:W + 1 + c0 + HW_TILE] = xv * m_last
            xs_ref[1 * Cin:2 * Cin, W + c0:W + c0 + HW_TILE] = xv
            xs_ref[2 * Cin:3 * Cin, W - 1 + c0:W - 1 + c0 + HW_TILE] = xv * m_first

    # ---- per-tile compute: 3 matmuls with K = 3*Cin, f32 accumulation --------
    toff = pl.multiple_of(t * HW_TILE, HW_TILE)       # 128-aligned window start
    win = xs_ref[:, pl.ds(toff, HW_TILE + 2 * W)]     # (3*Cin, HW_TILE + 2W)
    acc = jnp.zeros((Cout, HW_TILE), jnp.float32)
    for kh in range(3):
        patch = win[:, kh * W:kh * W + HW_TILE]       # (3*Cin, HW_TILE)
        acc = acc + jnp.dot(w_ref[kh], patch, preferred_element_type=jnp.float32)
    o_ref[0] = acc.astype(o_ref.dtype)                # lane-dense store


def _pick_hw_tile(HW, Cout, max_tile_lanes):
    # Largest multiple of 128 that divides HW, capped so the (Cout, HW_TILE)
    # f32 accumulator stays well inside the 256 KiB vreg file.
    budget = max(128, (160 * 1024) // (4 * max(Cout, 1)))
    target = max(128, min(max_tile_lanes, budget))
    best = None
    d = 128
    while d <= min(HW, target):
        if HW % d == 0:
            best = d
        d += 128
    return best if best is not None else HW           # fallback: single full tile


def conv_tsa_forward(x_nchw, w_oihw, alpha_oi11=None, *, operand_dtype=None,
                     max_tile_lanes=1024):
    """y = conv2d(x, w, stride=1, padding=1) [+ conv2d(x, alpha)].

    x: (N, Cin, H, W); w: (Cout, Cin, 3, 3); alpha: (Cout, Cin, 1, 1) or None.
    operand_dtype: optional matmul-operand dtype (e.g. jnp.bfloat16 for ~2x MXU
      and DMA throughput on v6e/v7x). Accumulation stays f32 and the output
      keeps x's dtype; default None keeps f32 operands (exact PyTorch match).
    """
    N, Cin, H, W = x_nchw.shape
    Cout = w_oihw.shape[0]
    HW = H * W
    out_dtype = jnp.dtype(x_nchw.dtype)
    op_dtype = jnp.dtype(operand_dtype) if operand_dtype is not None else out_dtype

    # Fold the 1x1 alpha adapter into the centre tap in f32 (exact for stride=1).
    w_eff = w_oihw.astype(jnp.float32)
    if alpha_oi11 is not None:
        w_eff = w_eff.at[:, :, 1, 1].add(alpha_oi11[:, :, 0, 0].astype(jnp.float32))
    # (Cout, Cin, kh, kw) -> (kh, Cout, kw*Cin): per-kh slab, kw folded into K.
    w_slab = jnp.transpose(w_eff, (2, 0, 3, 1)).reshape(3, Cout, 3 * Cin).astype(op_dtype)

    # Horizontal edge masks precomputed once (no per-step iota/mod/compare).
    q = jnp.arange(HW, dtype=jnp.int32) % W
    masks = jnp.stack([(q != W - 1), (q != 0)]).astype(op_dtype)      # (2, HW)

    x_flat = x_nchw.reshape(N, Cin, HW).astype(op_dtype)   # metadata-only if no cast

    HW_TILE = _pick_hw_tile(HW, Cout, max_tile_lanes)
    T = HW // HW_TILE

    kernel = functools.partial(_conv_tsa_kernel, W=W, HW=HW, HW_TILE=HW_TILE, Cin=Cin)

    # VMEM budget: double-buffered x / out blocks + kw-stacked scratch + masks.
    isz = op_dtype.itemsize
    need = (2 * Cin * HW * isz + 2 * Cout * HW_TILE * out_dtype.itemsize
            + 3 * Cin * (HW + 2 * W) * isz + 2 * HW * isz + (1 << 16))
    vmem_limit = int(min(96 * 2**20, max(32 * 2**20, 2 * need)))

    y_flat = pl.pallas_call(
        kernel,
        out_shape=jax.ShapeDtypeStruct((N, Cout, HW), out_dtype),
        grid_spec=pltpu.PrefetchScalarGridSpec(
            num_scalar_prefetch=0,
            grid=(N, T),
            in_specs=[
                pl.BlockSpec((2, HW), lambda n, t: (0, 0)),
                pl.BlockSpec((1, Cin, HW), lambda n, t: (n, 0, 0)),
                pl.BlockSpec((3, Cout, 3 * Cin), lambda n, t: (0, 0, 0)),
            ],
            out_specs=pl.BlockSpec((1, Cout, HW_TILE), lambda n, t: (n, 0, t)),
            scratch_shapes=[pltpu.VMEM((3 * Cin, HW + 2 * W), op_dtype)],
        ),
        compiler_params=pltpu.CompilerParams(
            dimension_semantics=("parallel", "arbitrary"),
            vmem_limit_bytes=vmem_limit),
    )(masks, x_flat, w_slab)

    return y_flat.reshape(N, Cout, H, W)               # metadata-only reshape


def _reference(x_nchw, w_oihw, alpha_oi11):
    dn = ("NCHW", "OIHW", "NCHW")
    y = lax.conv_general_dilated(x_nchw, w_oihw, window_strides=(1, 1),
                                 padding=((1, 1), (1, 1)), dimension_numbers=dn)
    if alpha_oi11 is not None:
        y = y + lax.conv_general_dilated(x_nchw, alpha_oi11, window_strides=(1, 1),
                                         padding=((0, 0), (0, 0)),
                                         dimension_numbers=dn)
    return y


if __name__ == "__main__":
    # small shapes: batch=2, in_planes=4, planes=8, spatial=16x16
    N, Cin, Cout, H, W = 2, 4, 8, 16, 16

    key = jax.random.PRNGKey(0)
    kx, kw = jax.random.split(key)

    x = jax.random.normal(kx, (N, Cin, H, W), dtype=jnp.float32)
    # frozen conv weight (deterministic synthetic init)
    w = jax.random.normal(kw, (Cout, Cin, 3, 3), dtype=jnp.float32) * 0.1
    # alpha initialized exactly like the module: torch.ones(planes, in_planes, 1, 1)
    alpha = jnp.ones((Cout, Cin, 1, 1), dtype=jnp.float32)

    y_ref = _reference(x, w, alpha)

    # exact f32 path (single spatial tile at this size)
    y = jax.block_until_ready(conv_tsa_forward(x, w, alpha))
    assert y.shape == (N, Cout, H, W)
    assert jnp.allclose(y, y_ref, atol=1e-4, rtol=1e-4), "f32 mismatch vs reference"

    # forced multi-tile spatial path (HW_TILE=128 -> 2 tiles) exercises the
    # cross-tile halo logic of the kw-stacked scratch
    y_tiled = jax.block_until_ready(conv_tsa_forward(x, w, alpha, max_tile_lanes=128))
    assert jnp.allclose(y_tiled, y_ref, atol=1e-4, rtol=1e-4), "tiled mismatch vs reference"

    # bf16-operand path (f32 accumulation) -- loose sanity check only; the
    # exactness guarantee belongs to the default f32 path.
    y_bf16 = jax.block_until_ready(
        conv_tsa_forward(x, w, alpha, operand_dtype=jnp.bfloat16))
    assert jnp.allclose(y_bf16, y_ref, atol=2e-1, rtol=1e-1), "bf16 mismatch vs reference"

    print("KERNEL_OK")
</pallas_src>

<mosaic_0001>
module attributes {stable_mosaic.version = 11 : i64} {
  func.func @_conv_tsa_kernel(%arg0: i32, %arg1: i32, %arg2: memref<2x256xf32, #tpu.memory_space<vmem>>, %arg3: memref<1x4x256xf32, #tpu.memory_space<vmem>>, %arg4: memref<3x8x12xf32, #tpu.memory_space<vmem>>, %arg5: memref<1x8x256xf32, #tpu.memory_space<vmem>>, %arg6: memref<12x288xf32, #tpu.memory_space<vmem>>) attributes {dimension_semantics = [#tpu.dimension_semantics<parallel>, #tpu.dimension_semantics<arbitrary>], iteration_bounds = array<i64: 2, 1>, scalar_prefetch = 0 : i64, scratch_operands = 1 : i64, tpu.core_type = #tpu.core_type<tc>, window_params = [{pipeline_mode = #tpu.pipeline_mode<synchronous>, transform_indices = @transform_0, window_bounds = array<i64: 2, 256>}, {transform_indices = @transform_1, window_bounds = array<i64: 1, 4, 256>}, {pipeline_mode = #tpu.pipeline_mode<synchronous>, transform_indices = @transform_2, window_bounds = array<i64: 3, 8, 12>}, {transform_indices = @transform_3, window_bounds = array<i64: 1, 8, 256>}]} {
    %c0_i32 = arith.constant 0 : i32
    %0 = arith.cmpi eq, %arg1, %c0_i32 : i32
    %1 = arith.extui %0 : i1 to i32
    %c0_i32_0 = arith.constant 0 : i32
    %2 = arith.cmpi ne, %1, %c0_i32_0 : i32
    scf.if %2 {
      %cst_14 = arith.constant 0.000000e+00 : f32
      %26 = vector.broadcast %cst_14 : f32 to vector<12x17xf32>
      %c0_15 = arith.constant 0 : index
      %c0_16 = arith.constant 0 : index
      %27 = vector.load %arg6[%c0_15, %c0_16] : memref<12x288xf32, #tpu.memory_space<vmem>>, vector<12x17xf32>
      tpu.vector_store %arg6[%c0_15, %c0_16], %26 {strides = array<i32>} : memref<12x288xf32, #tpu.memory_space<vmem>>, vector<12x17xf32>,
      %c0_17 = arith.constant 0 : index
      %c271 = arith.constant 271 : index
      %28 = vector.load %arg6[%c0_17, %c271] : memref<12x288xf32, #tpu.memory_space<vmem>>, vector<12x17xf32>
      tpu.vector_store %arg6[%c0_17, %c271], %26 {strides = array<i32>} : memref<12x288xf32, #tpu.memory_space<vmem>>, vector<12x17xf32>,
      %c0_18 = arith.constant 0 : index
      %c0_19 = arith.constant 0 : index
      %c0_20 = arith.constant 0 : index
      %29 = vector.load %arg3[%c0_18, %c0_19, %c0_20] : memref<1x4x256xf32, #tpu.memory_space<vmem>>, vector<1x4x256xf32>
      %30 = vector.shape_cast %29 : vector<1x4x256xf32> to vector<4x256xf32>
      %c0_21 = arith.constant 0 : index
      %c0_22 = arith.constant 0 : index
      %31 = vector.load %arg2[%c0_21, %c0_22] : memref<2x256xf32, #tpu.memory_space<vmem>>, vector<1x256xf32>
      %c1_23 = arith.constant 1 : index
      %c0_24 = arith.constant 0 : index
      %32 = vector.load %arg2[%c1_23, %c0_24] : memref<2x256xf32, #tpu.memory_space<vmem>>, vector<1x256xf32>
      %33 = vector.broadcast %31 : vector<1x256xf32> to vector<4x256xf32>
      %34 = arith.mulf %30, %33 : vector<4x256xf32>
      %c0_25 = arith.constant 0 : index
      %c17 = arith.constant 17 : index
      %35 = vector.load %arg6[%c0_25, %c17] : memref<12x288xf32, #tpu.memory_space<vmem>>, vector<4x256xf32>
      tpu.vector_store %arg6[%c0_25, %c17], %34 {strides = array<i32>} : memref<12x288xf32, #tpu.memory_space<vmem>>, vector<4x256xf32>,
      %c4 = arith.constant 4 : index
      %c16 = arith.constant 16 : index
      %36 = vector.load %arg6[%c4, %c16] : memref<12x288xf32, #tpu.memory_space<vmem>>, vector<4x256xf32>
      tpu.vector_store %arg6[%c4, %c16], %30 {strides = array<i32>} : memref<12x288xf32, #tpu.memory_space<vmem>>, vector<4x256xf32>,
      %37 = vector.broadcast %32 : vector<1x256xf32> to vector<4x256xf32>
      %38 = arith.mulf %30, %37 : vector<4x256xf32>
      %c8 = arith.constant 8 : index
      %c15 = arith.constant 15 : index
      %39 = vector.load %arg6[%c8, %c15] : memref<12x288xf32, #tpu.memory_space<vmem>>, vector<4x256xf32>
      tpu.vector_store %arg6[%c8, %c15], %38 {strides = array<i32>} : memref<12x288xf32, #tpu.memory_space<vmem>>, vector<4x256xf32>,
    } else {
    }
    %c256_i32 = arith.constant 256 : i32
    %3 = arith.muli %arg1, %c256_i32 : i32
    %4 = tpu.assume_multiple %3, 256 : i32
    %c0 = arith.constant 0 : index
    %5 = arith.index_cast %4 : i32 to index
    %6 = vector.load %arg6[%c0, %5] : memref<12x288xf32, #tpu.memory_space<vmem>>, vector<12x288xf32>
    %cst = arith.constant 0.000000e+00 : f32
    %7 = vector.broadcast %cst : f32 to vector<8x256xf32>
    %8 = vector.extract_strided_slice %6 {offsets = [0, 0], sizes = [12, 256], strides = [1, 1]} : vector<12x288xf32> to vector<12x256xf32>
    %c0_1 = arith.constant 0 : index
    %c0_2 = arith.constant 0 : index
    %c0_3 = arith.constant 0 : index
    %9 = vector.load %arg4[%c0_1, %c0_2, %c0_3] : memref<3x8x12xf32, #tpu.memory_space<vmem>>, vector<1x8x12xf32>
    %10 = vector.shape_cast %9 : vector<1x8x12xf32> to vector<8x12xf32>
    %cst_4 = arith.constant dense<0.000000e+00> : vector<8x256xf32>
    %11 = tpu.matmul %10, %8, %cst_4 {dimension_numbers = #tpu.dot_dimension_numbers<[1], [0], [0], [1], [0, 0, 1, 1], [], []>} : vector<8x12xf32>, vector<12x256xf32>, vector<8x256xf32> -> vector<8x256xf32>
    %12 = arith.addf %7, %11 : vector<8x256xf32>
    %13 = vector.extract_strided_slice %6 {offsets = [0, 16], sizes = [12, 256], strides = [1, 1]} : vector<12x288xf32> to vector<12x256xf32>
    %c1 = arith.constant 1 : index
    %c0_5 = arith.constant 0 : index
    %c0_6 = arith.constant 0 : index
    %14 = vector.load %arg4[%c1, %c0_5, %c0_6] : memref<3x8x12xf32, #tpu.memory_space<vmem>>, vector<1x8x12xf32>
    %15 = vector.shape_cast %14 : vector<1x8x12xf32> to vector<8x12xf32>
    %cst_7 = arith.constant dense<0.000000e+00> : vector<8x256xf32>
    %16 = tpu.matmul %15, %13, %cst_7 {dimension_numbers = #tpu.dot_dimension_numbers<[1], [0], [0], [1], [0, 0, 1, 1], [], []>} : vector<8x12xf32>, vector<12x256xf32>, vector<8x256xf32> -> vector<8x256xf32>
    %17 = arith.addf %12, %16 : vector<8x256xf32>
    %18 = vector.extract_strided_slice %6 {offsets = [0, 32], sizes = [12, 256], strides = [1, 1]} : vector<12x288xf32> to vector<12x256xf32>
    %c2 = arith.constant 2 : index
    %c0_8 = arith.constant 0 : index
    %c0_9 = arith.constant 0 : index
    %19 = vector.load %arg4[%c2, %c0_8, %c0_9] : memref<3x8x12xf32, #tpu.memory_space<vmem>>, vector<1x8x12xf32>
    %20 = vector.shape_cast %19 : vector<1x8x12xf32> to vector<8x12xf32>
    %cst_10 = arith.constant dense<0.000000e+00> : vector<8x256xf32>
    %21 = tpu.matmul %20, %18, %cst_10 {dimension_numbers = #tpu.dot_dimension_numbers<[1], [0], [0], [1], [0, 0, 1, 1], [], []>} : vector<8x12xf32>, vector<12x256xf32>, vector<8x256xf32> -> vector<8x256xf32>
    %22 = arith.addf %17, %21 : vector<8x256xf32>
    %c0_11 = arith.constant 0 : index
    %c0_12 = arith.constant 0 : index
    %c0_13 = arith.constant 0 : index
    %23 = vector.load %arg5[%c0_11, %c0_12, %c0_13] : memref<1x8x256xf32, #tpu.memory_space<vmem>>, vector<1x8x256xf32>
    %24 = vector.shape_cast %23 : vector<1x8x256xf32> to vector<8x256xf32>
    %25 = vector.shape_cast %22 : vector<8x256xf32> to vector<1x8x256xf32>
    tpu.vector_store %arg5[%c0_11, %c0_12, %c0_13], %25 {strides = array<i32>} : memref<1x8x256xf32, #tpu.memory_space<vmem>>, vector<1x8x256xf32>,
    return
  }
  func.func @transform_0(%arg0: i32, %arg1: i32) -> (i32, i32) {
    %c0_i32 = arith.constant 0 : i32
    %c0_i32_0 = arith.constant 0 : i32
    %c0_i32_1 = arith.constant 0 : i32
    return %c0_i32, %c0_i32_0 : i32, i32
  }
  func.func @transform_1(%arg0: i32, %arg1: i32) -> (i32, i32, i32) {
    %c0_i32 = arith.constant 0 : i32
    %c0_i32_0 = arith.constant 0 : i32
    %c0_i32_1 = arith.constant 0 : i32
    return %arg0, %c0_i32, %c0_i32_0 : i32, i32, i32
  }
  func.func @transform_2(%arg0: i32, %arg1: i32) -> (i32, i32, i32) {
    %c0_i32 = arith.constant 0 : i32
    %c0_i32_0 = arith.constant 0 : i32
    %c0_i32_1 = arith.constant 0 : i32
    %c0_i32_2 = arith.constant 0 : i32
    return %c0_i32, %c0_i32_0, %c0_i32_1 : i32, i32, i32
  }
  func.func @transform_3(%arg0: i32, %arg1: i32) -> (i32, i32, i32) {
    %c0_i32 = arith.constant 0 : i32
    %c0_i32_0 = arith.constant 0 : i32
    return %arg0, %c0_i32, %arg1 : i32, i32, i32
  }
}

</mosaic_0001>

<llo_original>
// kernel: tpu_custom_call.1
$region0: #{tpu_custom_call.1}
  #allocation0 [shape = 'u32[]', space=smem, size = 0x4, offset = 0x4, fixed_abs, tag = 'smem constant byte address 0x4 - core index']
  #allocation1 [shape = 'u32[144,128]{1,0:T(1,128)}', space=vmem, size = 0x12000, scoped, tag = 'internal scratch']
  #allocation2 [shape = 'f32[12,288]{1,0:T(8,128)}', space=vmem, size = 0x6000, scoped, tag = 'scratch operand']
  %s0 = inlined_call_operand.hbm [shape: f32[2,256], index: 0, kind: input, shape index: {}]
  %s1 = inlined_call_operand.hbm [shape: f32[2,4,256], index: 1, kind: input, shape index: {}]
  %s2 = inlined_call_operand.hbm [shape: f32[3,8,12], index: 2, kind: input, shape index: {}]
  %s3 = inlined_call_operand.hbm [shape: f32[2,8,256], index: 3, kind: output, shape index: {}]
  %s4 = sld [smem:[#allocation0]]
  $region61: #{tpu_custom_call.1} parent=0
    _
  %s6 = ssub.s32 1, %s4
  %s7 = scalar_select 0, %s6, %s4
  $region1: #{tpu_custom_call.1} parent=0
    #allocation3 [shape = 'u8[2048]{0}', space=vmem, size = 0x800, scoped, tag = 'input window, operand 0, single buffered']
    #allocation4 [shape = 's32[2]{0}', space=sflag, size = 0x8, scoped, tag = 'scoped memory for tpu_custom_call.1']
    #allocation5 [shape = 's32[2]{0}', space=sflag, size = 0x8, scoped, tag = 'scoped memory for tpu_custom_call.1']
    #allocation6 [shape = 'u8[8192]{0}', space=vmem, size = 0x2000, scoped, tag = 'input window, operand 1']
    #allocation7 [shape = 's32[2]{0}', space=sflag, size = 0x8, scoped, tag = 'scoped memory for tpu_custom_call.1']
    #allocation8 [shape = 'u8[12288]{0}', space=vmem, size = 0x3000, scoped, tag = 'input window, operand 2, single buffered']
    #allocation9 [shape = 'u8[16384]{0}', space=vmem, size = 0x4000, scoped, tag = 'output window, operand 0']
    %8 = vsyncpa [#allocation4], 0
    %9 = vsyncpa [#allocation7], 0
    %s10 = scalar_lea.sflag [#allocation7], 1
    %11 = vsyncpa %s10, 0
    %12 = vsyncpa [#allocation5], 0
    %s13 = scalar_lea.sflag [#allocation5], 1
    %14 = vsyncpa %s13, 0
    loop: start=0, step=1, limit=4
    $region2: #{tpu_custom_call.1} parent=1 // loop_pre_header
      _
    $region3: #{tpu_custom_call.1} parent=1 // loop_header
      %s16 = sphi 0, %s20
      %p17 = scmp.ge.s32.totalorder %s16, 4
      %s23 = sphi 0, %s35
      %s24 = sphi 0, %s31
      %s25 = sphi 0, %s23
      %s26 = sphi 0, %s24
      %s27 = sphi 0, %s25
      %s28 = sphi 0, %s26
      %s36 = sphi 0, %s36
      %s38 = sphi 0, %s36
      %s39 = sphi 0, %s38
      %s53 = sphi 0, %s39
      %s59 = sphi 0, %s61
      %s62 = sphi 0, %s59
      %s63 = sphi 0, %s62
      %s79 = sphi 0, %s63
      %s83 = sphi 0, %s83
      %s85 = sphi 0, %s83
      %s86 = sphi 0, %s85
      %s100 = sphi 0, %s86
      %s108 = sphi 0, %s110
      %s111 = sphi 0, %s108
      %s112 = sphi 0, %s111
      %s128 = sphi 0, %s112
    $region4: #{tpu_custom_call.1} parent=1 // loop_header_branch
      %19 = sbr.rel (%p17) target = $region8
    $region5: #{tpu_custom_call.1} parent=1 // loop_body
      %s21 = ssub.s32 %s16, 1
      %s22 = ssub.s32 %s16, 2
      %s29 = sadd.s32 1, %s24
      %p30 = scmp.ge.s32.totalorder %s29, 1
      %s31 = scalar_select %p30, 0, %s29
      %s32 = sadd.s32 1, %s23
      %s33 = scalar_select %p30, %s32, %s23
      %p34 = scmp.ge.s32.totalorder %s33, 2
      %s35 = scalar_select %p34, 0, %s33
      %s37 = sadd.s32 %s36, 1
      %p40 = scmp.eq.s32.totalorder %s16, 1
      %p41 = scmp.ne.s32.totalorder %s36, %s38
      %p42 = scmp.eq.s32.totalorder %s16, 0
      %p43 = por %p41, %p42
      %p44 = scmp.ne.s32.totalorder %s36, %s38
      %p45 = scmp.eq.s32.totalorder %s21, 1
      %p46 = por %p44, %p45
      %p47 = scmp.ne.s32.totalorder %s38, %s39
      %p48 = scmp.eq.s32.totalorder %s21, 0
      %p49 = por %p47, %p48
      %p50 = scmp.ne.s32.totalorder %s38, %s39
      %p51 = scmp.eq.s32.totalorder %s22, 1
      %p52 = por %p50, %p51
      %p54 = scmp.ne.s32.totalorder %s39, %s53
      %p55 = scmp.eq.s32.totalorder %s22, 0
      %p56 = por %p54, %p55
      %s57 = ssub.s32 %s23, %s35
      %p58 = scmp.eq.s32.totalorder %s57, 0
      %s60 = sadd.s32 %s59, 1
      %s61 = scalar_select %p58, %s59, %s60
      %p64 = pneg %p58
      %p65 = scmp.eq.s32.totalorder %s16, 1
      %p66 = por %p64, %p65
      %p67 = scmp.ne.s32.totalorder %s59, %s62
      %p68 = scmp.eq.s32.totalorder %s16, 0
      %p69 = por %p67, %p68
      %p70 = scmp.ne.s32.totalorder %s59, %s62
      %p71 = scmp.eq.s32.totalorder %s21, 1
      %p72 = por %p70, %p71
      %p73 = scmp.ne.s32.totalorder %s62, %s63
      %p74 = scmp.eq.s32.totalorder %s21, 0
      %p75 = por %p73, %p74
      %p76 = scmp.ne.s32.totalorder %s62, %s63
      %p77 = scmp.eq.s32.totalorder %s22, 1
      %p78 = por %p76, %p77
      %p80 = scmp.ne.s32.totalorder %s63, %s79
      %p81 = scmp.eq.s32.totalorder %s22, 0
      %p82 = por %p80, %p81
      %s84 = sadd.s32 %s83, 1
      %p87 = scmp.eq.s32.totalorder %s16, 1
      %p88 = scmp.ne.s32.totalorder %s83, %s85
      %p89 = scmp.eq.s32.totalorder %s16, 0
      %p90 = por %p88, %p89
      %p91 = scmp.ne.s32.totalorder %s83, %s85
      %p92 = scmp.eq.s32.totalorder %s21, 1
      %p93 = por %p91, %p92
      %p94 = scmp.ne.s32.totalorder %s85, %s86
      %p95 = scmp.eq.s32.totalorder %s21, 0
      %p96 = por %p94, %p95
      %p97 = scmp.ne.s32.totalorder %s85, %s86
      %p98 = scmp.eq.s32.totalorder %s22, 1
      %p99 = por %p97, %p98
      %p101 = scmp.ne.s32.totalorder %s86, %s100
      %p102 = scmp.eq.s32.totalorder %s22, 0
      %p103 = por %p101, %p102
      %s104 = ssub.s32 %s23, %s35
      %s105 = ssub.s32 %s24, %s31
      %s106 = sor.u32 %s104, %s105
      %p107 = scmp.eq.s32.totalorder %s106, 0
      %s109 = sadd.s32 %s108, 1
      %s110 = scalar_select %p107, %s108, %s109
      %p113 = pneg %p107
      %p114 = scmp.eq.s32.totalorder %s16, 1
      %p115 = por %p113, %p114
      %p116 = scmp.ne.s32.totalorder %s108, %s111
      %p117 = scmp.eq.s32.totalorder %s16, 0
      %p118 = por %p116, %p117
      %p119 = scmp.ne.s32.totalorder %s108, %s111
      %p120 = scmp.eq.s32.totalorder %s21, 1
      %p121 = por %p119, %p120
      %p122 = scmp.ne.s32.totalorder %s111, %s112
      %p123 = scmp.eq.s32.totalorder %s21, 0
      %p124 = por %p122, %p123
      %p125 = scmp.ne.s32.totalorder %s111, %s112
      %p126 = scmp.eq.s32.totalorder %s22, 1
      %p127 = por %p125, %p126
      %p129 = scmp.ne.s32.totalorder %s112, %s128
      %p130 = scmp.eq.s32.totalorder %s22, 0
      %p131 = por %p129, %p130
      %p132 = scmp.le.s32.totalorder 1, %s16
      %p133 = scmp.lt.s32.totalorder %s16, 3
      %p134 = pnand %p132, %p133
      %p135 = pneg %p134
      // Predicated region
      $region9: #{tpu_custom_call.1} parent=5 // pred_check
        _
      $region10: #{tpu_custom_call.1} parent=5 // pred_check_branch
        %137 = sbr.rel (%p134) target = $region12
      $region11: #{tpu_custom_call.1} parent=5 // pred_region
        %s138 = ssub.s32 %s16, 1
        // Predicated region
        $region13: #{tpu_custom_call.1} parent=11 // pred_check
          %p139 = pneg %p49
        $region14: #{tpu_custom_call.1} parent=11 // pred_check_branch
          %141 = sbr.rel (%p139) target = $region16
        $region15: #{tpu_custom_call.1} parent=11 // pred_region
          %s143 = ssub.s32 64, 64
          %144 = vsyncadd [#allocation4], %s143
          %s146 = sshll.u32 [#allocation3], 4
          %s147 = int_to_ptr.vmem [resolvable:$true] %s146
          %149 = dma.hbm_to_vmem [thread:$0]  %s0, 64, %s147, [#allocation4]
        $region16: #{tpu_custom_call.1} parent=11 // pred_fallthru
          _
        // Predicated region
        $region17: #{tpu_custom_call.1} parent=11 // pred_check
          %p150 = pneg %p96
        $region18: #{tpu_custom_call.1} parent=11 // pred_check_branch
          %152 = sbr.rel (%p150) target = $region20
        $region19: #{tpu_custom_call.1} parent=11 // pred_region
          %s154 = ssub.s32 384, 384
          %155 = vsyncadd [#allocation7], %s154
          %s156 = sshll.u32 [#allocation8], 4
          %s157 = int_to_ptr.vmem [resolvable:$true] %s156
          %162 = dma.hbm_to_vmem [thread:$0]  %s2, 384, %s157, [#allocation7], 128, 128, 8
        $region20: #{tpu_custom_call.1} parent=11 // pred_fallthru
          _
      $region12: #{tpu_custom_call.1} parent=5 // pred_fallthru
        _
      %p163 = scmp.lt.s32.totalorder %s16, 2
      // Predicated region
      $region21: #{tpu_custom_call.1} parent=5 // pred_check
        %p164 = pneg %p163
      $region22: #{tpu_custom_call.1} parent=5 // pred_check_branch
        %166 = sbr.rel (%p164) target = $region24
      $region23: #{tpu_custom_call.1} parent=5 // pred_region
        // Predicated region
        $region25: #{tpu_custom_call.1} parent=23 // pred_check
          %p167 = pneg %p69
        $region26: #{tpu_custom_call.1} parent=23 // pred_check_branch
          %169 = sbr.rel (%p167) target = $region28
        $region27: #{tpu_custom_call.1} parent=23 // pred_region
          %s170 = sand.u32 %s16, 1
          %s171 = scalar_lea.sflag [#allocation7], %s170
          %s172 = sand.u32 %s59, 1
          %s173 = smul.addr %s172, 8
          %s174 = scalar_lea.vmem [#allocation6], %s173
          %s176 = ssub.s32 128, 128
          %177 = vsyncadd %s171, %s176
          %s178 = smul.addr %s23, 2
          %s179 = smul.addr %s178, 64
          %s180 = scalar_lea.hbm %s1, %s179
          %s182 = sshll.u32 %s174, 4
          %s183 = int_to_ptr.vmem [resolvable:$true] %s182
          %185 = dma.hbm_to_vmem [thread:$0]  %s180, 128, %s183, %s171
        $region28: #{tpu_custom_call.1} parent=23 // pred_fallthru
          _
      $region24: #{tpu_custom_call.1} parent=5 // pred_fallthru
        _
      %p186 = scmp.le.s32.totalorder 1, %s16
      %p187 = scmp.lt.s32.totalorder %s16, 3
      %p188 = pnand %p186, %p187
      %p189 = pneg %p188
      // Predicated region
      $region29: #{tpu_custom_call.1} parent=5 // pred_check
        _
      $region30: #{tpu_custom_call.1} parent=5 // pred_check_branch
        %191 = sbr.rel (%p188) target = $region32
      $region31: #{tpu_custom_call.1} parent=5 // pred_region
        %s192 = ssub.s32 %s16, 1
        // Predicated region
        $region33: #{tpu_custom_call.1} parent=31 // pred_check
          %p193 = pneg %p49
        $region34: #{tpu_custom_call.1} parent=31 // pred_check_branch
          %195 = sbr.rel (%p193) target = $region36
        $region35: #{tpu_custom_call.1} parent=31 // pred_region
          %196 = dma.done [#allocation4], 64
        $region36: #{tpu_custom_call.1} parent=31 // pred_fallthru
          _
        %s197 = sand.u32 %s21, 1
        %s198 = scalar_lea.sflag [#allocation7], %s197
        %s199 = sand.u32 %s62, 1
        %s200 = smul.addr %s199, 8
        %s201 = scalar_lea.vmem [#allocation6], %s200
        // Predicated region
        $region37: #{tpu_custom_call.1} parent=31 // pred_check
          %p202 = pneg %p75
        $region38: #{tpu_custom_call.1} parent=31 // pred_check_branch
          %204 = sbr.rel (%p202) target = $region40
        $region39: #{tpu_custom_call.1} parent=31 // pred_region
          %205 = dma.done %s198, 128
        $region40: #{tpu_custom_call.1} parent=31 // pred_fallthru
          _
        // Predicated region
        $region41: #{tpu_custom_call.1} parent=31 // pred_check
          %p206 = pneg %p96
        $region42: #{tpu_custom_call.1} parent=31 // pred_check_branch
          %208 = sbr.rel (%p206) target = $region44
        $region43: #{tpu_custom_call.1} parent=31 // pred_region
          %209 = dma.done [#allocation7], 384
        $region44: #{tpu_custom_call.1} parent=31 // pred_fallthru
          _
        %p210 = pneg %p49
        %p211 = pneg %p46
        %s212 = sand.u32 %s21, 1
        %s213 = scalar_lea.sflag [#allocation7], %s212
        %s214 = sand.u32 %s62, 1
        %s215 = smul.addr %s214, 8
        %s216 = scalar_lea.vmem [#allocation6], %s215
        %p217 = pneg %p75
        %p218 = pneg %p72
        %p219 = pneg %p96
        %p220 = pneg %p93
        %p221 = pneg %p124
        %p222 = pneg %p121
        %s223 = sand.u32 %s111, 1
        %s224 = scalar_lea.sflag [#allocation5], %s223
        %s225 = sand.u32 %s111, 1
        %s226 = smul.addr %s225, 16
        %s227 = scalar_lea.vmem [#allocation9], %s226
        %s228 = smul.u32 2, %s26
        %p229 = scmp.eq.s32.totalorder %s26, 0
        // Predicated region
        $region45: #{tpu_custom_call.1} parent=31 // pred_check
          %p230 = pneg %p229
        $region46: #{tpu_custom_call.1} parent=31 // pred_check_branch
          %232 = sbr.rel (%p230) target = $region48
        $region47: #{tpu_custom_call.1} parent=31 // pred_region
          %vm233 = vcmask 138240
          %234 = vst.msk [vmem:[#allocation2] sm:$0xff] %vm233, 0.0
          %vm235 = vcmask 134144
          %236 = vst.msk [vmem:[#allocation2 + $0x18] sm:$0xf] %vm235, 0.0
          %vm237 = vcmask 261240
          %238 = vst.msk [vmem:[#allocation2 + $0x10] sm:$0xff] %vm237, 0.0
          %vm239 = vcmask 257144
          %240 = vst.msk [vmem:[#allocation2 + $0x28] sm:$0xf] %vm239, 0.0
          %v241 = vld [vmem:[%s201] sm:$0xff]
          %v242 = vld [vmem:[#allocation3] ss:$2 sm:$0x3]
          %s243 = scalar_lea.vmem [#allocation3], 1
          %v244 = vld [vmem:[%s243] ss:$2 sm:$0x3]
          %v246 = vlaneseq
          %v247 = vshrl.u32 %v246, 7
          %v248 = vsub.s32 0, %v247
          %v249 = vrot.slane %v242, %v248
          %v250 = vlaneseq
          %v251 = vshrl.u32 %v250, 7
          %v252 = vsub.s32 1, %v251
          %v253 = vrot.slane %v242, %v252
          %v254 = vcombine.low %v249, %v253
          %v256 = vmul.f32 %v241, %v254
          %v258 = vcombine.high %v256, %v256
          %259 = vrot.lane.b32.xlu0 %v256, 17
          %v260 = vpop.permute.xlu0 %259
          %261 = vrot.lane.b32.xlu0 %v258, 17
          %v262 = vpop.permute.xlu0 %261
          %v263 = vsel %vm233, %v260, %v262
          %vm267 = vcmask 1043592
          %268 = vst.msk [vmem:[#allocation2] sm:$0xf] %vm267, %v260
          %269 = vst [vmem:[#allocation2 + $0x8] sm:$0xf] %v263
          %270 = vst.msk [vmem:[#allocation2 + $0x10] sm:$0xf] %vm235, %v262
          %v272 = vcombine.low %v241, %v241
          %273 = vrot.lane.b32.xlu0 %v272, 16
          %v274 = vpop.permute.xlu0 %273
          %275 = vrot.lane.b32.xlu0 %v241, 16
          %v276 = vpop.permute.xlu0 %275
          %vm277 = vcmask 130048
          %v278 = vsel %vm277, %v274, %v276
          %vm282 = vcmask 1047684
          %283 = vst.msk [vmem:[#allocation2] sm:$0xf0] %vm282, %v274
          %284 = vst [vmem:[#allocation2 + $0x8] sm:$0xf0] %v278
          %vm285 = vcmask 130052
          %286 = vst.msk [vmem:[#allocation2 + $0x10] sm:$0xf0] %vm285, %v276
          %v288 = vlaneseq
          %v289 = vshrl.u32 %v288, 7
          %v290 = vsub.s32 0, %v289
          %v291 = vrot.slane %v244, %v290
          %v292 = vlaneseq
          %v293 = vshrl.u32 %v292, 7
          %v294 = vsub.s32 1, %v293
          %v295 = vrot.slane %v244, %v294
          %v296 = vcombine.low %v291, %v295
          %v298 = vmul.f32 %v241, %v296
          %v300 = vcombine.high %v298, %v298
          %301 = vrot.lane.b32.xlu0 %v298, 15
          %v302 = vpop.permute.xlu0 %301
          %303 = vrot.lane.b32.xlu0 %v300, 15
          %v304 = vpop.permute.xlu0 %303
          %vm305 = vcmask 121856
          %v306 = vsel %vm305, %v302, %v304
          %vm310 = vcmask 1043576
          %311 = vst.msk [vmem:[#allocation2 + $0x18] sm:$0xf] %vm310, %v302
          %312 = vst [vmem:[#allocation2 + $0x20] sm:$0xf] %v306
          %vm313 = vcmask 117760
          %314 = vst.msk [vmem:[#allocation2 + $0x28] sm:$0xf] %vm313, %v304
        $region48: #{tpu_custom_call.1} parent=31 // pred_fallthru
          _
        %s315 = smul.u32 %s26, 256
        %s316 = sshra.s32 %s315, 7
        %s317 = sand.u32 %s315, 127
        %s318 = smul.addr %s316, 8
        %s319 = scalar_lea.vmem [#allocation2], %s318
        %v320 = vld [vmem:[%s319] sm:$0xff]
        %v321 = vld [vmem:[%s319 + $0x8] sm:$0xff]
        %v322 = vld [vmem:[%s319 + $0x10] sm:$0xff]
        %v323 = vld [vmem:[%s319 + $0x18] sm:$0xf]
        %v324 = vld [vmem:[%s319 + $0x20] sm:$0xf]
        %v325 = vld [vmem:[%s319 + $0x28] sm:$0xf]
        %v326 = vld [vmem:[#allocation8] sm:$0xff]
        %s327 = scalar_lea.vmem [#allocation8], 8
        %v328 = vld [vmem:[%s327] sm:$0xff]
        %335 = vrot.lane.b32.xlu0 %v320, 112
        %v336 = vpop.permute.xlu0 %335
        %337 = vrot.lane.b32.xlu0 %v321, 112
        %v338 = vpop.permute.xlu0 %337
        %339 = vrot.lane.b32.xlu0 %v322, 112
        %v340 = vpop.permute.xlu0 %339
        %341 = vrot.lane.b32.xlu0 %v323, 112
        %v342 = vpop.permute.xlu0 %341
        %343 = vrot.lane.b32.xlu0 %v324, 112
        %v344 = vpop.permute.xlu0 %343
        %345 = vrot.lane.b32.xlu0 %v325, 112
        %v346 = vpop.permute.xlu0 %345
        %vm347 = vcmask 916480
        %v348 = vsel %vm347, %v336, %v338
        %v349 = vsel %vm347, %v338, %v340
        %v350 = vsel %vm347, %v342, %v344
        %v351 = vsel %vm347, %v344, %v346
        %vm354 = vcmask 97280
        %v356 = vsel %vm354, %v328, 0
        %vm358 = vcmask 1043456
        %v359 = vsel %vm358, %v350, 0
        %v361 = vsel %vm358, %v351, 0
        %363 = vmatprep.subr.mxu0 %v349
        %364 = vmatpush1.msra.mxu0 %v348
        %365 = vmatprep.subr.mxu0 %v361
        %366 = vmatpush1.msra.mxu0 %v359
        %367 = vmatprep.subr.mxu0 0.0
        %368 = vmatpush1.msra.mxu0 0.0
        %369 = vmatprep.subr.mxu0 0.0
        %370 = vmatpush1.msra.mxu0 0.0
        %371 = vmatprep.subr.mxu0 0.0
        %372 = vmatpush1.msra.mxu0 0.0
        %373 = vmatprep.subr.mxu0 0.0
        %374 = vmatpush1.msra.mxu0 0.0
        %375 = vmatprep.subr.mxu0 0.0
        %376 = vmatpush1.msra.mxu0 0.0
        %377 = vmatprep.subr.mxu0 0.0
        %378 = vmatpush1.msra.mxu0 0.0
        %379 = vmatprep.subr.mxu0 0.0
        %380 = vmatpush1.msra.mxu0 0.0
        %381 = vmatprep.subr.mxu0 0.0
        %382 = vmatpush1.msra.mxu0 0.0
        %383 = vmatprep.subr.mxu0 0.0
        %384 = vmatpush1.msra.mxu0 0.0
        %385 = vmatprep.subr.mxu0 0.0
        %386 = vmatpush1.msra.mxu0 0.0
        %387 = vmatprep.subr.mxu0 0.0
        %388 = vmatpush1.msra.mxu0 0.0
        %389 = vmatprep.subr.mxu0 0.0
        %390 = vmatpush1.msra.mxu0 0.0
        %391 = vmatprep.subr.mxu0 0.0
        %392 = vmatpush1.msra.mxu0 0.0
        %393 = vmatprep.subr.mxu0 0.0
        %394 = vmatpush1.msra.mxu0 0.0
        %395 = vmatprep.subr.mxu0 0.0
        %396 = vmatpush1.msra.mxu0 0.0
        %397 = vmatprep.subr.mxu0 0.0
        %398 = vmatpush1.msra.mxu0 0.0
        %399 = vmatprep.subr.mxu0 0.0
        %400 = vmatpush1.msra.mxu0 0.0
        %401 = vmatprep.subr.mxu0 0.0
        %402 = vmatpush1.msra.mxu0 0.0
        %403 = vmatprep.subr.mxu0 0.0
        %404 = vmatpush1.msra.mxu0 0.0
        %405 = vmatprep.subr.mxu0 0.0
        %406 = vmatpush1.msra.mxu0 0.0
        %407 = vmatprep.subr.mxu0 0.0
        %408 = vmatpush1.msra.mxu0 0.0
        %409 = vmatprep.subr.mxu0 0.0
        %410 = vmatpush1.msra.mxu0 0.0
        %411 = vmatprep.subr.mxu0 0.0
        %412 = vmatpush1.msra.mxu0 0.0
        %413 = vmatprep.subr.mxu0 0.0
        %414 = vmatpush1.msra.mxu0 0.0
        %415 = vmatprep.subr.mxu0 0.0
        %416 = vmatpush1.msra.mxu0 0.0
        %417 = vmatprep.subr.mxu0 0.0
        %418 = vmatpush1.msra.mxu0 0.0
        %419 = vmatprep.subr.mxu0 0.0
        %420 = vmatpush1.msra.mxu0 0.0
        %421 = vmatprep.subr.mxu0 0.0
        %422 = vmatpush1.msra.mxu0 0.0
        %423 = vmatprep.subr.mxu0 0.0
        %424 = vmatpush1.msra.mxu0 0.0
        %425 = vmatprep.subr.mxu0 0.0
        %426 = vmatpush1.msra.mxu0 0.0
        %427 = vmatprep.mubr.f32.mxu0 0.0
        %428 = vmatmul.mubr.f32.gmra.mrb[0].mxu0 %v356
        %v429 = vpop.f32.mrb[0].mxu0
        %v430 = vadd.f32 0.0, %v429
        %v431 = vpop.f32.mrb[0].mxu0
        %v432 = vadd.f32 0.0, %v431
        %433 = vdwg.mxu0
        %v435 = vsel %vm354, %v326, 0
        %v437 = vsel %vm358, %v323, 0
        %v439 = vsel %vm358, %v324, 0
        %441 = vmatprep.subr.mxu0 %v321
        %442 = vmatpush1.msra.mxu0 %v320
        %443 = vmatprep.subr.mxu0 %v439
        %444 = vmatpush1.msra.mxu0 %v437
        %445 = vmatprep.subr.mxu0 0.0
        %446 = vmatpush1.msra.mxu0 0.0
        %447 = vmatprep.subr.mxu0 0.0
        %448 = vmatpush1.msra.mxu0 0.0
        %449 = vmatprep.subr.mxu0 0.0
        %450 = vmatpush1.msra.mxu0 0.0
        %451 = vmatprep.subr.mxu0 0.0
        %452 = vmatpush1.msra.mxu0 0.0
        %453 = vmatprep.subr.mxu0 0.0
        %454 = vmatpush1.msra.mxu0 0.0
        %455 = vmatprep.subr.mxu0 0.0
        %456 = vmatpush1.msra.mxu0 0.0
        %457 = vmatprep.subr.mxu0 0.0
        %458 = vmatpush1.msra.mxu0 0.0
        %459 = vmatprep.subr.mxu0 0.0
        %460 = vmatpush1.msra.mxu0 0.0
        %461 = vmatprep.subr.mxu0 0.0
        %462 = vmatpush1.msra.mxu0 0.0
        %463 = vmatprep.subr.mxu0 0.0
        %464 = vmatpush1.msra.mxu0 0.0
        %465 = vmatprep.subr.mxu0 0.0
        %466 = vmatpush1.msra.mxu0 0.0
        %467 = vmatprep.subr.mxu0 0.0
        %468 = vmatpush1.msra.mxu0 0.0
        %469 = vmatprep.subr.mxu0 0.0
        %470 = vmatpush1.msra.mxu0 0.0
        %471 = vmatprep.subr.mxu0 0.0
        %472 = vmatpush1.msra.mxu0 0.0
        %473 = vmatprep.subr.mxu0 0.0
        %474 = vmatpush1.msra.mxu0 0.0
        %475 = vmatprep.subr.mxu0 0.0
        %476 = vmatpush1.msra.mxu0 0.0
        %477 = vmatprep.subr.mxu0 0.0
        %478 = vmatpush1.msra.mxu0 0.0
        %479 = vmatprep.subr.mxu0 0.0
        %480 = vmatpush1.msra.mxu0 0.0
        %481 = vmatprep.subr.mxu0 0.0
        %482 = vmatpush1.msra.mxu0 0.0
        %483 = vmatprep.subr.mxu0 0.0
        %484 = vmatpush1.msra.mxu0 0.0
        %485 = vmatprep.subr.mxu0 0.0
        %486 = vmatpush1.msra.mxu0 0.0
        %487 = vmatprep.subr.mxu0 0.0
        %488 = vmatpush1.msra.mxu0 0.0
        %489 = vmatprep.subr.mxu0 0.0
        %490 = vmatpush1.msra.mxu0 0.0
        %491 = vmatprep.subr.mxu0 0.0
        %492 = vmatpush1.msra.mxu0 0.0
        %493 = vmatprep.subr.mxu0 0.0
        %494 = vmatpush1.msra.mxu0 0.0
        %495 = vmatprep.subr.mxu0 0.0
        %496 = vmatpush1.msra.mxu0 0.0
        %497 = vmatprep.subr.mxu0 0.0
        %498 = vmatpush1.msra.mxu0 0.0
        %499 = vmatprep.subr.mxu0 0.0
        %500 = vmatpush1.msra.mxu0 0.0
        %501 = vmatprep.subr.mxu0 0.0
        %502 = vmatpush1.msra.mxu0 0.0
        %503 = vmatprep.subr.mxu0 0.0
        %504 = vmatpush1.msra.mxu0 0.0
        %505 = vmatprep.mubr.f32.mxu0 0.0
        %506 = vmatmul.mubr.f32.gmra.mrb[0].mxu0 %v435
        %v507 = vpop.f32.mrb[0].mxu0
        %v508 = vadd.f32 %v430, %v507
        %v509 = vpop.f32.mrb[0].mxu0
        %v510 = vadd.f32 %v432, %v509
        %511 = vdwg.mxu0
        %s512 = scalar_lea.vmem [#allocation8], 16
        %v513 = vld [vmem:[%s512] sm:$0xff]
        %514 = vrot.lane.b32.xlu0 %v320, 96
        %v515 = vpop.permute.xlu0 %514
        %516 = vrot.lane.b32.xlu0 %v321, 96
        %v517 = vpop.permute.xlu0 %516
        %518 = vrot.lane.b32.xlu0 %v322, 96
        %v519 = vpop.permute.xlu0 %518
        %520 = vrot.lane.b32.xlu0 %v323, 96
        %v521 = vpop.permute.xlu0 %520
        %522 = vrot.lane.b32.xlu0 %v324, 96
        %v523 = vpop.permute.xlu0 %522
        %524 = vrot.lane.b32.xlu0 %v325, 96
        %v525 = vpop.permute.xlu0 %524
        %vm526 = vcmask 785408
        %v527 = vsel %vm526, %v515, %v517
        %v528 = vsel %vm526, %v517, %v519
        %v529 = vsel %vm526, %v521, %v523
        %v530 = vsel %vm526, %v523, %v525
        %v534 = vsel %vm354, %v513, 0
        %v536 = vsel %vm358, %v529, 0
        %v538 = vsel %vm358, %v530, 0
        %540 = vmatprep.subr.mxu0 %v528
        %541 = vmatpush1.msra.mxu0 %v527
        %542 = vmatprep.subr.mxu0 %v538
        %543 = vmatpush1.msra.mxu0 %v536
        %544 = vmatprep.subr.mxu0 0.0
        %545 = vmatpush1.msra.mxu0 0.0
        %546 = vmatprep.subr.mxu0 0.0
        %547 = vmatpush1.msra.mxu0 0.0
        %548 = vmatprep.subr.mxu0 0.0
        %549 = vmatpush1.msra.mxu0 0.0
        %550 = vmatprep.subr.mxu0 0.0
        %551 = vmatpush1.msra.mxu0 0.0
        %552 = vmatprep.subr.mxu0 0.0
        %553 = vmatpush1.msra.mxu0 0.0
        %554 = vmatprep.subr.mxu0 0.0
        %555 = vmatpush1.msra.mxu0 0.0
        %556 = vmatprep.subr.mxu0 0.0
        %557 = vmatpush1.msra.mxu0 0.0
        %558 = vmatprep.subr.mxu0 0.0
        %559 = vmatpush1.msra.mxu0 0.0
        %560 = vmatprep.subr.mxu0 0.0
        %561 = vmatpush1.msra.mxu0 0.0
        %562 = vmatprep.subr.mxu0 0.0
        %563 = vmatpush1.msra.mxu0 0.0
        %564 = vmatprep.subr.mxu0 0.0
        %565 = vmatpush1.msra.mxu0 0.0
        %566 = vmatprep.subr.mxu0 0.0
        %567 = vmatpush1.msra.mxu0 0.0
        %568 = vmatprep.subr.mxu0 0.0
        %569 = vmatpush1.msra.mxu0 0.0
        %570 = vmatprep.subr.mxu0 0.0
        %571 = vmatpush1.msra.mxu0 0.0
        %572 = vmatprep.subr.mxu0 0.0
        %573 = vmatpush1.msra.mxu0 0.0
        %574 = vmatprep.subr.mxu0 0.0
        %575 = vmatpush1.msra.mxu0 0.0
        %576 = vmatprep.subr.mxu0 0.0
        %577 = vmatpush1.msra.mxu0 0.0
        %578 = vmatprep.subr.mxu0 0.0
        %579 = vmatpush1.msra.mxu0 0.0
        %580 = vmatprep.subr.mxu0 0.0
        %581 = vmatpush1.msra.mxu0 0.0
        %582 = vmatprep.subr.mxu0 0.0
        %583 = vmatpush1.msra.mxu0 0.0
        %584 = vmatprep.subr.mxu0 0.0
        %585 = vmatpush1.msra.mxu0 0.0
        %586 = vmatprep.subr.mxu0 0.0
        %587 = vmatpush1.msra.mxu0 0.0
        %588 = vmatprep.subr.mxu0 0.0
        %589 = vmatpush1.msra.mxu0 0.0
        %590 = vmatprep.subr.mxu0 0.0
        %591 = vmatpush1.msra.mxu0 0.0
        %592 = vmatprep.subr.mxu0 0.0
        %593 = vmatpush1.msra.mxu0 0.0
        %594 = vmatprep.subr.mxu0 0.0
        %595 = vmatpush1.msra.mxu0 0.0
        %596 = vmatprep.subr.mxu0 0.0
        %597 = vmatpush1.msra.mxu0 0.0
        %598 = vmatprep.subr.mxu0 0.0
        %599 = vmatpush1.msra.mxu0 0.0
        %600 = vmatprep.subr.mxu0 0.0
        %601 = vmatpush1.msra.mxu0 0.0
        %602 = vmatprep.subr.mxu0 0.0
        %603 = vmatpush1.msra.mxu0 0.0
        %604 = vmatprep.mubr.f32.mxu0 0.0
        %605 = vmatmul.mubr.f32.gmra.mrb[0].mxu0 %v534
        %v606 = vpop.f32.mrb[0].mxu0
        %v607 = vadd.f32 0.0, %v606
        %v608 = vpop.f32.mrb[0].mxu0
        %v609 = vadd.f32 0.0, %v608
        %610 = vdwg.mxu0
        %v611 = vadd.f32 %v508, %v607
        %v612 = vadd.f32 %v510, %v609
        %613 = vst [vmem:[%s227] sm:$0xff] %v611
        %614 = vst [vmem:[%s227 + $0x8] sm:$0xff] %v612
        %s615 = sand.u32 %s111, 1
        %s616 = scalar_lea.sflag [#allocation5], %s615
        %s617 = sand.u32 %s111, 1
        %s618 = smul.addr %s617, 16
        %s619 = scalar_lea.vmem [#allocation9], %s618
        // Predicated region
        $region49: #{tpu_custom_call.1} parent=31 // pred_check
          %p620 = pneg %p121
        $region50: #{tpu_custom_call.1} parent=31 // pred_check_branch
          %622 = sbr.rel (%p620) target = $region52
        $region51: #{tpu_custom_call.1} parent=31 // pred_region
          %s623 = smul.u32 2, %s26
          %s625 = ssub.s32 256, 256
          %626 = vsyncadd %s616, %s625
          %s627 = smul.addr %s25, 2
          %s628 = sadd.s32 %s623, %s627
          %s629 = smul.addr %s628, 128
          %s630 = scalar_lea.hbm %s3, %s629
          %s632 = sshll.u32 %s619, 4
          %s633 = int_to_ptr.vmem [resolvable:$true] %s632
          %635 = dma.vmem_to_hbm [thread:$0]  %s633, 256, %s630, %s616
        $region52: #{tpu_custom_call.1} parent=31 // pred_fallthru
          _
      $region32: #{tpu_custom_call.1} parent=5 // pred_fallthru
        _
      %p636 = scmp.le.s32.totalorder 2, %s16
      // Predicated region
      $region53: #{tpu_custom_call.1} parent=5 // pred_check
        %p637 = pneg %p636
      $region54: #{tpu_custom_call.1} parent=5 // pred_check_branch
        %639 = sbr.rel (%p637) target = $region56
      $region55: #{tpu_custom_call.1} parent=5 // pred_region
        %s640 = ssub.s32 %s16, 2
        // Predicated region
        $region57: #{tpu_custom_call.1} parent=55 // pred_check
          %p641 = pneg %p127
        $region58: #{tpu_custom_call.1} parent=55 // pred_check_branch
          %643 = sbr.rel (%p641) target = $region60
        $region59: #{tpu_custom_call.1} parent=55 // pred_region
          %s644 = sand.u32 %s112, 1
          %s645 = scalar_lea.sflag [#allocation5], %s644
          %s646 = sand.u32 %s112, 1
          %s647 = smul.addr %s646, 16
          %s648 = scalar_lea.vmem [#allocation9], %s647
          %649 = dma.done %s645, 256
        $region60: #{tpu_custom_call.1} parent=55 // pred_fallthru
          _
      $region56: #{tpu_custom_call.1} parent=5 // pred_fallthru
        _
    $region6: #{tpu_custom_call.1} parent=1 // loop_footer
      %s20 = sadd.s32 1, %s16
    $region7: #{tpu_custom_call.1} parent=1 // loop_footer_branch
      %15 = sbr.rel target = $region3
    $region8: #{tpu_custom_call.1} parent=1 // loop_exit
      _
    %650 = vsyncpa [#allocation4], 1
    %s651 = scalar_lea.sflag [#allocation4], 1
    %652 = vsyncpa %s651, 1
    %653 = vsyncpa [#allocation7], 1
    %s654 = scalar_lea.sflag [#allocation7], 1
    %655 = vsyncpa %s654, 1
    %656 = vsyncpa [#allocation5], 1
    %s657 = scalar_lea.sflag [#allocation5], 1
    %658 = vsyncpa %s657, 1

</llo_original>
